<compile_context>
chip_gen: v7x
topology: tpu7x:2x2x1
jax: 0.10.0
libtpu: 0.0.40
codegen_flags: <defaults>
</compile_context>

<pallas_src>
import functools

import jax
import jax.numpy as jnp
from jax.experimental import pallas as pl
from jax.experimental.pallas import tpu as pltpu


# --------------------------------------------------------------------------------------
# Generation-aware tiling.
# --------------------------------------------------------------------------------------
def _round_up(x, m):
    return ((x + m - 1) // m) * m


def _device_kind():
    try:
        return jax.devices()[0].device_kind.lower()
    except Exception:
        return ""


def _tiling_params(n):
    """Return (npad, tq, tp, vmem_limit_bytes, bf16_exp) for this TPU generation."""
    kind = _device_kind()
    if "v7" in kind:
        # 64 MiB physical VMEM, 2 TCs: small per-slab budget, insist on >=2 grid steps.
        vmem_limit, slab_budget, max_tq, want_multi = 48 * 2**20, int(2.5 * 2**20), 512, True
    elif "v6" in kind or "v5" in kind:
        # 128 MiB physical VMEM: big blocks amortize per-step overhead.
        vmem_limit, slab_budget, max_tq, want_multi = 96 * 2**20, 12 * 2**20, 1024, False
    else:
        vmem_limit, slab_budget, max_tq, want_multi = 64 * 2**20, 6 * 2**20, 512, False
    # bf16 EUP exp only where the hardware has it (NOT v5e).
    bf16_exp = ("v6" in kind) or ("v7" in kind)

    npad = _round_up(max(n, 8), 8) if n <= 128 else _round_up(n, 128)
    budget_rows = max(8, slab_budget // (4 * npad))   # rows s.t. one (tq,npad) f32 slab fits budget
    tq = 8
    for cand in (1024, 512, 256, 128, 64, 32, 16, 8):
        if cand > max_tq or cand > budget_rows or npad % cand != 0:
            continue
        if want_multi and npad >= 16 and cand > npad // 2:
            continue   # keep >=2 grid steps so both v7x TensorCores get work
        tq = cand
        break
    # Projection row block: (1, tp) f_dst output block needs tp % 128 == 0 (or full row).
    tp = tq if tq % 128 == 0 else npad
    return npad, tq, tp, vmem_limit, bf16_exp


# --------------------------------------------------------------------------------------
# Kernel 1: row-blocked projections.  h_aug = [h | 1], f_src column, f_dst lane-dense row.
# --------------------------------------------------------------------------------------
def project_kernel(x_ref, w_ref, asrc_ref, adstr_ref, haug_ref, fsrc_ref, fdst_ref):
    xb = x_ref[...].astype(jnp.bfloat16)
    wb = w_ref[...].astype(jnp.bfloat16)
    h = jnp.dot(xb, wb, preferred_element_type=jnp.float32)          # (tp, Fout+1) f32
    hb = h.astype(jnp.bfloat16)
    haug_ref[...] = hb                                               # bf16 for MXU reuse

    # Source-side logits as a (tp, 1) column (broadcasts over lanes in kernel 2).
    fsrc_ref[...] = jnp.dot(
        hb, asrc_ref[...].astype(jnp.bfloat16), preferred_element_type=jnp.float32
    )

    # Destination-side logits directly as a lane-dense (1, tp) row: contract last dims
    # of (1, Fout+1) x (tp, Fout+1) (MXU trans-B pattern) -> no XLU transpose anywhere.
    fdst_ref[...] = jax.lax.dot_general(
        adstr_ref[...].astype(jnp.bfloat16), hb,
        dimension_numbers=(((1,), (1,)), ((), ())),
        preferred_element_type=jnp.float32,
    )


# --------------------------------------------------------------------------------------
# Kernel 2: row-blocked masked softmax + aggregation (denominator folded into the matmul).
# --------------------------------------------------------------------------------------
def attention_kernel(fsrc_ref, fdst_ref, adj_ref, haug_ref, out_ref, *,
                     alpha, concat, fout, bf16_exp):
    # e[i, j] = LeakyReLU(f_src[i] + f_dst[j]); fused LeakyReLU + edge mask (one pass).
    e = fsrc_ref[...] + fdst_ref[...]                                # (TQ, Npad) f32
    masked = jnp.where(adj_ref[...] > 0,
                       jnp.where(e > 0, e, alpha * e),
                       jnp.float32(-9e15))

    z = masked - jnp.max(masked, axis=1, keepdims=True)              # stable softmax logits
    if bf16_exp:
        p = jnp.exp(z.astype(jnp.bfloat16))                          # bf16 EUP path (v6e/v7x)
    else:
        p = jnp.exp(z).astype(jnp.bfloat16)                          # f32 EUP (v5e-safe)

    # Unnormalized aggregation; the trailing ones column of h_aug gives the row sums,
    # so no cross-lane sum-reduce and no full-(TQ,N) scale are needed.
    hp_aug = jnp.dot(p, haug_ref[...], preferred_element_type=jnp.float32)  # (TQ, Fout+1)
    denom = hp_aug[:, fout:fout + 1]                                 # (TQ, 1) row sums
    hp = hp_aug[:, :fout] * pl.reciprocal(denom, approx=True)        # EUP vrcp

    if concat:
        # ELU (alpha=1.0); clamp exp argument so positives cannot overflow.
        hp = jnp.where(hp > 0, hp, jnp.exp(jnp.minimum(hp, 0.0)) - 1.0)

    out_ref[...] = hp.astype(out_ref.dtype)


# --------------------------------------------------------------------------------------
# Wrapper.
# --------------------------------------------------------------------------------------
def adjacency_mask(adj):
    """Precompute (and cache / reuse across forward calls) the int8 edge mask."""
    return (adj > 0).astype(jnp.int8)


def gat_forward(x, W, a, adj, *, alpha=0.2, concat=True):
    N, Fin = x.shape
    Fout = W.shape[1]

    x = x.astype(jnp.float32)
    W = W.astype(jnp.float32)
    a = a.astype(jnp.float32)
    if adj.dtype != jnp.int8:
        adj = adjacency_mask(adj)   # fallback; callers should pass the cached int8 mask

    npad, tq, tp, vmem_limit, bf16_exp = _tiling_params(N)
    pad = npad - N

    # Host-side (free) augmentations:
    #   x_aug = [x | 1],  W_aug = [[W, 0], [0, 1]]  ->  x_aug @ W_aug = [x @ W | 1].
    x_aug = jnp.concatenate([x, jnp.ones((N, 1), jnp.float32)], axis=1)
    W_aug = (jnp.zeros((Fin + 1, Fout + 1), jnp.float32)
             .at[:Fin, :Fout].set(W)
             .at[Fin, Fout].set(1.0))
    a_src = jnp.concatenate([a[:Fout, :], jnp.zeros((1, 1), jnp.float32)], axis=0)        # (Fout+1, 1)
    a_dst_row = jnp.concatenate([a[Fout:, :], jnp.zeros((1, 1), jnp.float32)], axis=0).T  # (1, Fout+1)

    if pad:
        x_aug = jnp.pad(x_aug, ((0, pad), (0, 0)))
        adj = jnp.pad(adj, ((0, pad), (0, pad)))

    cparams = pltpu.CompilerParams(
        dimension_semantics=("parallel",),
        vmem_limit_bytes=vmem_limit,
    )

    # ---- Kernel 1: projections (row-blocked) ------------------------------------------
    h_aug, f_src, f_dst_row = pl.pallas_call(
        project_kernel,
        out_shape=(
            jax.ShapeDtypeStruct((npad, Fout + 1), jnp.bfloat16),
            jax.ShapeDtypeStruct((npad, 1), jnp.float32),
            jax.ShapeDtypeStruct((1, npad), jnp.float32),
        ),
        grid=(npad // tp,),
        in_specs=[
            pl.BlockSpec((tp, Fin + 1), lambda i: (i, 0)),        # x rows (pipelined)
            pl.BlockSpec((Fin + 1, Fout + 1), lambda i: (0, 0)),  # W_aug resident
            pl.BlockSpec((Fout + 1, 1), lambda i: (0, 0)),        # a_src resident
            pl.BlockSpec((1, Fout + 1), lambda i: (0, 0)),        # a_dst row resident
        ],
        out_specs=(
            pl.BlockSpec((tp, Fout + 1), lambda i: (i, 0)),
            pl.BlockSpec((tp, 1), lambda i: (i, 0)),
            pl.BlockSpec((1, tp), lambda i: (0, i)),
        ),
        compiler_params=cparams,
    )(x_aug, W_aug, a_src, a_dst_row)

    # ---- Kernel 2: masked softmax + aggregation (row-blocked) --------------------------
    kernel = functools.partial(attention_kernel, alpha=alpha, concat=concat,
                               fout=Fout, bf16_exp=bf16_exp)
    out = pl.pallas_call(
        kernel,
        out_shape=jax.ShapeDtypeStruct((npad, Fout), x.dtype),
        grid=(npad // tq,),
        in_specs=[
            pl.BlockSpec((tq, 1), lambda i: (i, 0)),              # f_src row-block
            pl.BlockSpec((1, npad), lambda i: (0, 0)),            # f_dst lane-dense row
            pl.BlockSpec((tq, npad), lambda i: (i, 0)),           # int8 adjacency slab
            pl.BlockSpec((npad, Fout + 1), lambda i: (0, 0)),     # h_aug (bf16) resident
        ],
        out_specs=pl.BlockSpec((tq, Fout), lambda i: (i, 0)),
        compiler_params=cparams,
    )(f_src, f_dst_row, adj, h_aug)

    return out[:N] if pad else out


# --------------------------------------------------------------------------------------
# Pure-JAX reference (module semantics, same mixed precision at MXU boundaries).
# --------------------------------------------------------------------------------------
def gat_reference(x, W, a, adj, *, alpha=0.2, concat=True):
    f32, bf16 = jnp.float32, jnp.bfloat16
    Fout = W.shape[1]
    h = jnp.dot(x.astype(bf16), W.astype(bf16), preferred_element_type=f32)
    hb = h.astype(bf16)
    f_src = jnp.dot(hb, a[:Fout].astype(bf16), preferred_element_type=f32)
    f_dst = jnp.dot(hb, a[Fout:].astype(bf16), preferred_element_type=f32)
    e = f_src + f_dst.T
    e = jnp.where(e > 0, e, alpha * e)
    masked = jnp.where(adj > 0, e, f32(-9e15))
    attn = jax.nn.softmax(masked, axis=1)
    hp = jnp.dot(attn.astype(bf16), hb, preferred_element_type=f32)
    if concat:
        hp = jnp.where(hp > 0, hp, jnp.exp(jnp.minimum(hp, 0.0)) - 1.0)
    return hp


def xavier_uniform(key, shape, gain):
    fan_in, fan_out = shape[0], shape[1]
    bound = gain * jnp.sqrt(6.0 / (fan_in + fan_out))
    return jax.random.uniform(key, shape, jnp.float32, minval=-bound, maxval=bound)


def _run_case(key, N, in_features, out_features, alpha, concat):
    k_w, k_a, k_x, k_adj = jax.random.split(key, 4)
    W = xavier_uniform(k_w, (in_features, out_features), gain=1.414)
    a = xavier_uniform(k_a, (2 * out_features, 1), gain=1.414)
    x = jax.random.normal(k_x, (N, in_features), jnp.float32)
    adj = (jax.random.uniform(k_adj, (N, N)) > 0.5).astype(jnp.float32)
    adj = adj + jnp.eye(N, dtype=jnp.float32)   # self-loops so every row has an edge

    # Precompute/cache the int8 edge mask once (not rebuilt inside the forward pass).
    adj_i8 = jax.block_until_ready(adjacency_mask(adj))

    out = gat_forward(x, W, a, adj_i8, alpha=alpha, concat=concat)
    jax.block_until_ready(out)

    assert out.shape == (N, out_features)
    assert bool(jnp.all(jnp.isfinite(out)))

    ref = gat_reference(x, W, a, adj, alpha=alpha, concat=concat)
    err = float(jnp.max(jnp.abs(out - ref)))
    assert bool(jnp.allclose(out, ref, atol=5e-2, rtol=5e-2)), f"max abs err {err}"
    return out


if __name__ == "__main__":
    alpha, concat = 0.2, True   # dropout=0.6 unused (eval mode)
    key = jax.random.PRNGKey(0)
    k0, k1 = jax.random.split(key)

    # Small shape consistent with the module (single row block).
    _run_case(k0, N=8, in_features=32, out_features=16, alpha=alpha, concat=concat)

    # Larger graph exercising the gridded, padded, int8-adjacency path (multi-step grid).
    _run_case(k1, N=384, in_features=32, out_features=16, alpha=alpha, concat=concat)

    print("KERNEL_OK")
</pallas_src>

<mosaic_0001>
module attributes {stable_mosaic.version = 11 : i64} {
  func.func @project_kernel(%arg0: i32, %arg1: memref<8x33xf32, #tpu.memory_space<vmem>>, %arg2: memref<33x17xf32, #tpu.memory_space<vmem>>, %arg3: memref<17x1xf32, #tpu.memory_space<vmem>>, %arg4: memref<1x17xf32, #tpu.memory_space<vmem>>, %arg5: memref<8x17xbf16, #tpu.memory_space<vmem>>, %arg6: memref<8x1xf32, #tpu.memory_space<vmem>>, %arg7: memref<1x8xf32, #tpu.memory_space<vmem>>) attributes {dimension_semantics = [#tpu.dimension_semantics<parallel>], iteration_bounds = array<i64: 1>, scalar_prefetch = 0 : i64, scratch_operands = 0 : i64, tpu.core_type = #tpu.core_type<tc>, window_params = [{transform_indices = @transform_0, window_bounds = array<i64: 8, 33>}, {pipeline_mode = #tpu.pipeline_mode<synchronous>, transform_indices = @transform_1, window_bounds = array<i64: 33, 17>}, {pipeline_mode = #tpu.pipeline_mode<synchronous>, transform_indices = @transform_2, window_bounds = array<i64: 17, 1>}, {pipeline_mode = #tpu.pipeline_mode<synchronous>, transform_indices = @transform_3, window_bounds = array<i64: 1, 17>}, {transform_indices = @transform_4, window_bounds = array<i64: 8, 17>}, {transform_indices = @transform_5, window_bounds = array<i64: 8, 1>}, {transform_indices = @transform_6, window_bounds = array<i64: 1, 8>}]} {
    %c0 = arith.constant 0 : index
    %c0_0 = arith.constant 0 : index
    %0 = vector.load %arg1[%c0, %c0_0] : memref<8x33xf32, #tpu.memory_space<vmem>>, vector<8x33xf32>
    %1 = arith.truncf %0 : vector<8x33xf32> to vector<8x33xbf16>
    %c0_1 = arith.constant 0 : index
    %c0_2 = arith.constant 0 : index
    %2 = vector.load %arg2[%c0_1, %c0_2] : memref<33x17xf32, #tpu.memory_space<vmem>>, vector<33x17xf32>
    %3 = arith.truncf %2 : vector<33x17xf32> to vector<33x17xbf16>
    %cst = arith.constant dense<0.000000e+00> : vector<8x17xf32>
    %4 = tpu.matmul %1, %3, %cst {dimension_numbers = #tpu.dot_dimension_numbers<[1], [0], [0], [1], [0, 0, 1, 1], [], []>} : vector<8x33xbf16>, vector<33x17xbf16>, vector<8x17xf32> -> vector<8x17xf32>
    %5 = arith.truncf %4 : vector<8x17xf32> to vector<8x17xbf16>
    %c0_3 = arith.constant 0 : index
    %c0_4 = arith.constant 0 : index
    %6 = vector.load %arg5[%c0_3, %c0_4] : memref<8x17xbf16, #tpu.memory_space<vmem>>, vector<8x17xbf16>
    tpu.vector_store %arg5[%c0_3, %c0_4], %5 {strides = array<i32>} : memref<8x17xbf16, #tpu.memory_space<vmem>>, vector<8x17xbf16>,
    %c0_5 = arith.constant 0 : index
    %c0_6 = arith.constant 0 : index
    %7 = vector.load %arg3[%c0_5, %c0_6] : memref<17x1xf32, #tpu.memory_space<vmem>>, vector<17x1xf32>
    %8 = arith.truncf %7 : vector<17x1xf32> to vector<17x1xbf16>
    %cst_7 = arith.constant dense<0.000000e+00> : vector<8x1xf32>
    %9 = tpu.matmul %5, %8, %cst_7 {dimension_numbers = #tpu.dot_dimension_numbers<[1], [0], [0], [1], [0, 0, 1, 1], [], []>} : vector<8x17xbf16>, vector<17x1xbf16>, vector<8x1xf32> -> vector<8x1xf32>
    %c0_8 = arith.constant 0 : index
    %c0_9 = arith.constant 0 : index
    %10 = vector.load %arg6[%c0_8, %c0_9] : memref<8x1xf32, #tpu.memory_space<vmem>>, vector<8x1xf32>
    tpu.vector_store %arg6[%c0_8, %c0_9], %9 {strides = array<i32>} : memref<8x1xf32, #tpu.memory_space<vmem>>, vector<8x1xf32>,
    %c0_10 = arith.constant 0 : index
    %c0_11 = arith.constant 0 : index
    %11 = vector.load %arg4[%c0_10, %c0_11] : memref<1x17xf32, #tpu.memory_space<vmem>>, vector<1x17xf32>
    %12 = arith.truncf %11 : vector<1x17xf32> to vector<1x17xbf16>
    %cst_12 = arith.constant dense<0.000000e+00> : vector<1x8xf32>
    %13 = tpu.matmul %12, %5, %cst_12 {dimension_numbers = #tpu.dot_dimension_numbers<[1], [1], [0], [0], [0, 0, 1, 0], [], []>} : vector<1x17xbf16>, vector<8x17xbf16>, vector<1x8xf32> -> vector<1x8xf32>
    %c0_13 = arith.constant 0 : index
    %c0_14 = arith.constant 0 : index
    %14 = vector.load %arg7[%c0_13, %c0_14] : memref<1x8xf32, #tpu.memory_space<vmem>>, vector<1x8xf32>
    tpu.vector_store %arg7[%c0_13, %c0_14], %13 {strides = array<i32>} : memref<1x8xf32, #tpu.memory_space<vmem>>, vector<1x8xf32>,
    return
  }
  func.func @transform_0(%arg0: i32) -> (i32, i32) {
    %c0_i32 = arith.constant 0 : i32
    %c0_i32_0 = arith.constant 0 : i32
    return %arg0, %c0_i32 : i32, i32
  }
  func.func @transform_1(%arg0: i32) -> (i32, i32) {
    %c0_i32 = arith.constant 0 : i32
    %c0_i32_0 = arith.constant 0 : i32
    %c0_i32_1 = arith.constant 0 : i32
    return %c0_i32, %c0_i32_0 : i32, i32
  }
  func.func @transform_2(%arg0: i32) -> (i32, i32) {
    %c0_i32 = arith.constant 0 : i32
    %c0_i32_0 = arith.constant 0 : i32
    %c0_i32_1 = arith.constant 0 : i32
    return %c0_i32, %c0_i32_0 : i32, i32
  }
  func.func @transform_3(%arg0: i32) -> (i32, i32) {
    %c0_i32 = arith.constant 0 : i32
    %c0_i32_0 = arith.constant 0 : i32
    %c0_i32_1 = arith.constant 0 : i32
    return %c0_i32, %c0_i32_0 : i32, i32
  }
  func.func @transform_4(%arg0: i32) -> (i32, i32) {
    %c0_i32 = arith.constant 0 : i32
    %c0_i32_0 = arith.constant 0 : i32
    return %arg0, %c0_i32 : i32, i32
  }
  func.func @transform_5(%arg0: i32) -> (i32, i32) {
    %c0_i32 = arith.constant 0 : i32
    %c0_i32_0 = arith.constant 0 : i32
    return %arg0, %c0_i32 : i32, i32
  }
  func.func @transform_6(%arg0: i32) -> (i32, i32) {
    %c0_i32 = arith.constant 0 : i32
    %c0_i32_0 = arith.constant 0 : i32
    return %c0_i32, %arg0 : i32, i32
  }
}

</mosaic_0001>

<llo_original>
// kernel: tpu_custom_call.1
$region0: #{tpu_custom_call.1}
  #allocation0 [shape = 'u32[]', space=smem, size = 0x4, offset = 0x4, fixed_abs, tag = 'smem constant byte address 0x4 - core index']
  #allocation1 [shape = 'u32[144,128]{1,0:T(1,128)}', space=vmem, size = 0x12000, scoped, tag = 'internal scratch']
  %s0 = inlined_call_operand.hbm [shape: f32[8,33], index: 0, kind: input, shape index: {}]
  %s1 = inlined_call_operand.hbm [shape: f32[33,17], index: 1, kind: input, shape index: {}]
  %s2 = inlined_call_operand.hbm [shape: f32[17,1], index: 2, kind: input, shape index: {}]
  %s3 = inlined_call_operand.hbm [shape: f32[1,17], index: 3, kind: input, shape index: {}]
  %s4 = inlined_call_operand.hbm [shape: bf16[8,17], index: 4, kind: output, shape index: {0}]
  %s5 = inlined_call_operand.hbm [shape: f32[8,1], index: 5, kind: output, shape index: {1}]
  %s6 = inlined_call_operand.hbm [shape: f32[1,8], index: 6, kind: output, shape index: {2}]
  %7 = xla_tuple %s4, %s5, %s6
  %s8 = sld [smem:[#allocation0]]
  $region58: #{tpu_custom_call.1} parent=0
    _
  %s10 = ssub.s32 1, %s8
  %s11 = scalar_select 0, %s10, %s8
  $region1: #{tpu_custom_call.1} parent=0
    #allocation2 [shape = 'u8[4096]{0}', space=vmem, size = 0x1000, scoped, tag = 'input window, operand 0, single buffered']
    #allocation3 [shape = 's32[1]{0}', space=sflag, size = 0x4, scoped, tag = 'scoped memory for tpu_custom_call.1']
    #allocation4 [shape = 's32[1]{0}', space=sflag, size = 0x4, scoped, tag = 'scoped memory for tpu_custom_call.1']
    #allocation5 [shape = 'u8[20480]{0}', space=vmem, size = 0x5000, scoped, tag = 'input window, operand 1, single buffered']
    #allocation6 [shape = 's32[1]{0}', space=sflag, size = 0x4, scoped, tag = 'scoped memory for tpu_custom_call.1']
    #allocation7 [shape = 'u8[12288]{0}', space=vmem, size = 0x3000, scoped, tag = 'input window, operand 2, single buffered']
    #allocation8 [shape = 'u8[512]{0}', space=vmem, size = 0x400, scoped, tag = 'input window, operand 3, single buffered']
    #allocation9 [shape = 's32[1]{0}', space=sflag, size = 0x4, scoped, tag = 'scoped memory for tpu_custom_call.1']
    #allocation10 [shape = 'u8[2048]{0}', space=vmem, size = 0x800, scoped, tag = 'output window, operand 0, single buffered']
    #allocation11 [shape = 'u8[4096]{0}', space=vmem, size = 0x1000, scoped, tag = 'output window, operand 1, single buffered']
    #allocation12 [shape = 's32[1]{0}', space=sflag, size = 0x4, scoped, tag = 'scoped memory for tpu_custom_call.1']
    #allocation13 [shape = 'u8[512]{0}', space=vmem, size = 0x400, scoped, tag = 'output window, operand 2, single buffered']
    %12 = vsyncpa [#allocation3], 0
    %13 = vsyncpa [#allocation6], 0
    %14 = vsyncpa [#allocation9], 0
    %15 = vsyncpa [#allocation4], 0
    %16 = vsyncpa [#allocation12], 0
    // Predicated region
    $region2: #{tpu_custom_call.1} parent=1 // pred_check
      _
    $region3: #{tpu_custom_call.1} parent=1 // pred_check_branch
      %18 = sbr.rel (0) target = $region5
    $region4: #{tpu_custom_call.1} parent=1 // pred_region
      %s20 = ssub.s32 128, 128
      %21 = vsyncadd [#allocation3], %s20
      %s23 = sshll.u32 [#allocation2], 4
      %s24 = int_to_ptr.vmem [resolvable:$true] %s23
      %26 = dma.hbm_to_vmem [thread:$0]  %s0, 128, %s24, [#allocation3]
    $region5: #{tpu_custom_call.1} parent=1 // pred_fallthru
      _
    // Predicated region
    $region6: #{tpu_custom_call.1} parent=1 // pred_check
      _
    $region7: #{tpu_custom_call.1} parent=1 // pred_check_branch
      %28 = sbr.rel (0) target = $region9
    $region8: #{tpu_custom_call.1} parent=1 // pred_region
      %s30 = ssub.s32 640, 640
      %31 = vsyncadd [#allocation6], %s30
      %s32 = sshll.u32 [#allocation5], 4
      %s33 = int_to_ptr.vmem [resolvable:$true] %s32
      %38 = dma.hbm_to_vmem [thread:$0]  %s1, 640, %s33, [#allocation6], 128, 128, 8
    $region9: #{tpu_custom_call.1} parent=1 // pred_fallthru
      _
    // Predicated region
    $region10: #{tpu_custom_call.1} parent=1 // pred_check
      _
    $region11: #{tpu_custom_call.1} parent=1 // pred_check_branch
      %40 = sbr.rel (0) target = $region13
    $region12: #{tpu_custom_call.1} parent=1 // pred_region
      %s42 = ssub.s32 384, 384
      %43 = vsyncadd [#allocation6], %s42
      %s44 = sshll.u32 [#allocation7], 4
      %s45 = int_to_ptr.vmem [resolvable:$true] %s44
      %50 = dma.hbm_to_vmem [thread:$0]  %s2, 384, %s45, [#allocation6], 128, 128, 8
    $region13: #{tpu_custom_call.1} parent=1 // pred_fallthru
      _
    // Predicated region
    $region14: #{tpu_custom_call.1} parent=1 // pred_check
      _
    $region15: #{tpu_custom_call.1} parent=1 // pred_check_branch
      %52 = sbr.rel (0) target = $region17
    $region16: #{tpu_custom_call.1} parent=1 // pred_region
      %s54 = ssub.s32 16, 16
      %55 = vsyncadd [#allocation9], %s54
      %s57 = sshll.u32 [#allocation8], 4
      %s58 = int_to_ptr.vmem [resolvable:$true] %s57
      %60 = dma.hbm_to_vmem [thread:$0]  %s3, 16, %s58, [#allocation9]
    $region17: #{tpu_custom_call.1} parent=1 // pred_fallthru
      _
    // Predicated region
    $region18: #{tpu_custom_call.1} parent=1 // pred_check
      _
    $region19: #{tpu_custom_call.1} parent=1 // pred_check_branch
      %62 = sbr.rel (0) target = $region21
    $region20: #{tpu_custom_call.1} parent=1 // pred_region
      %63 = dma.done [#allocation3], 128
    $region21: #{tpu_custom_call.1} parent=1 // pred_fallthru
      _
    // Predicated region
    $region22: #{tpu_custom_call.1} parent=1 // pred_check
      _
    $region23: #{tpu_custom_call.1} parent=1 // pred_check_branch
      %65 = sbr.rel (0) target = $region25
    $region24: #{tpu_custom_call.1} parent=1 // pred_region
      %66 = dma.done [#allocation6], 640
    $region25: #{tpu_custom_call.1} parent=1 // pred_fallthru
      _
    // Predicated region
    $region26: #{tpu_custom_call.1} parent=1 // pred_check
      _
    $region27: #{tpu_custom_call.1} parent=1 // pred_check_branch
      %68 = sbr.rel (0) target = $region29
    $region28: #{tpu_custom_call.1} parent=1 // pred_region
      %69 = dma.done [#allocation6], 384
    $region29: #{tpu_custom_call.1} parent=1 // pred_fallthru
      _
    // Predicated region
    $region30: #{tpu_custom_call.1} parent=1 // pred_check
      _
    $region31: #{tpu_custom_call.1} parent=1 // pred_check_branch
      %71 = sbr.rel (0) target = $region33
    $region32: #{tpu_custom_call.1} parent=1 // pred_region
      %72 = dma.done [#allocation9], 16
    $region33: #{tpu_custom_call.1} parent=1 // pred_fallthru
      _
    %v74 = vld [vmem:[#allocation2] sm:$0xff]
    %v75 = vpack.c.bf16 %v74, %v74
    %v76 = vld [vmem:[#allocation5] sm:$0xff]
    %v77 = vld [vmem:[#allocation5 + $0x8] sm:$0xff]
    %v78 = vld [vmem:[#allocation5 + $0x10] sm:$0xff]
    %v79 = vld [vmem:[#allocation5 + $0x18] sm:$0xff]
    %v80 = vld [vmem:[#allocation5 + $0x20] sm:$0x1]
    %v81 = vpack.c.bf16 %v77, %v76
    %v82 = vpack.c.bf16 %v79, %v78
    %v83 = vpack.c.bf16 %v80, %v80
    %vm84 = vcmask 269312
    %v86 = vsel %vm84, %v75, 0
    %vm88 = vcmask 1040384
    %v89 = vsel 0, 4294967295, 65535
    %v90 = vsel %vm88, %v89, 0
    %v92 = vand.u32 %v83, %v90
    %94 = vmatprep.subr.bf16.mxu0 0
    %95 = vmatpush1.bf16.msra.mxu0 %v81
    %96 = vmatprep.subr.bf16.mxu0 0
    %97 = vmatpush1.bf16.msra.mxu0 %v82
    %98 = vmatprep.subr.bf16.mxu0 0
    %99 = vmatpush1.bf16.msra.mxu0 %v92
    %100 = vmatprep.subr.bf16.mxu0 0
    %101 = vmatpush1.bf16.msra.mxu0 0
    %102 = vmatprep.subr.bf16.mxu0 0
    %103 = vmatpush1.bf16.msra.mxu0 0
    %104 = vmatprep.subr.bf16.mxu0 0
    %105 = vmatpush1.bf16.msra.mxu0 0
    %106 = vmatprep.subr.bf16.mxu0 0
    %107 = vmatpush1.bf16.msra.mxu0 0
    %108 = vmatprep.subr.bf16.mxu0 0
    %109 = vmatpush1.bf16.msra.mxu0 0
    %110 = vmatprep.subr.bf16.mxu0 0
    %111 = vmatpush1.bf16.msra.mxu0 0
    %112 = vmatprep.subr.bf16.mxu0 0
    %113 = vmatpush1.bf16.msra.mxu0 0
    %114 = vmatprep.subr.bf16.mxu0 0
    %115 = vmatpush1.bf16.msra.mxu0 0
    %116 = vmatprep.subr.bf16.mxu0 0
    %117 = vmatpush1.bf16.msra.mxu0 0
    %118 = vmatprep.subr.bf16.mxu0 0
    %119 = vmatpush1.bf16.msra.mxu0 0
    %120 = vmatprep.subr.bf16.mxu0 0
    %121 = vmatpush1.bf16.msra.mxu0 0
    %122 = vmatprep.subr.bf16.mxu0 0
    %123 = vmatpush1.bf16.msra.mxu0 0
    %124 = vmatprep.subr.bf16.mxu0 0
    %125 = vmatpush1.bf16.msra.mxu0 0
    %126 = vmatprep.mubr.bf16.mxu0 0
    %127 = vmatmul.mubr.bf16.gmra.mrb[0].mxu0 %v86
    %v128 = vpop.f32.mrb[0].mxu0
    %v129 = vadd.f32 0.0, %v128
    %v130 = vpop.f32.mrb[0].mxu0
    %v131 = vpop.f32.mrb[0].mxu0
    %v132 = vpop.f32.mrb[0].mxu0
    %133 = vdwg.mxu0
    %v134 = vpack.c.bf16 %v129, %v129
    %vm135 = vcmask 134144
    %136 = vst.msk [vmem:[#allocation10] sm:$0xf] %vm135, %v134
    %v137 = vld [vmem:[#allocation7] sm:$0xff]
    %v138 = vld [vmem:[#allocation7 + $0x8] sm:$0xff]
    %v139 = vld [vmem:[#allocation7 + $0x10] sm:$0x1]
    %v140 = vpack.c.bf16 %v138, %v137
    %v141 = vpack.c.bf16 %v139, %v139
    %vm142 = vcmask 138240
    %v144 = vsel %vm142, %v134, 0
    %v147 = vand.u32 %v141, %v90
    %149 = vmatprep.subr.bf16.mxu0 0
    %150 = vmatpush1.bf16.msra.mxu0 %v140
    %151 = vmatprep.subr.bf16.mxu0 0
    %152 = vmatpush1.bf16.msra.mxu0 %v147
    %153 = vmatprep.subr.bf16.mxu0 0
    %154 = vmatpush1.bf16.msra.mxu0 0
    %155 = vmatprep.subr.bf16.mxu0 0
    %156 = vmatpush1.bf16.msra.mxu0 0
    %157 = vmatprep.subr.bf16.mxu0 0
    %158 = vmatpush1.bf16.msra.mxu0 0
    %159 = vmatprep.subr.bf16.mxu0 0
    %160 = vmatpush1.bf16.msra.mxu0 0
    %161 = vmatprep.subr.bf16.mxu0 0
    %162 = vmatpush1.bf16.msra.mxu0 0
    %163 = vmatprep.subr.bf16.mxu0 0
    %164 = vmatpush1.bf16.msra.mxu0 0
    %165 = vmatprep.subr.bf16.mxu0 0
    %166 = vmatpush1.bf16.msra.mxu0 0
    %167 = vmatprep.subr.bf16.mxu0 0
    %168 = vmatpush1.bf16.msra.mxu0 0
    %169 = vmatprep.subr.bf16.mxu0 0
    %170 = vmatpush1.bf16.msra.mxu0 0
    %171 = vmatprep.subr.bf16.mxu0 0
    %172 = vmatpush1.bf16.msra.mxu0 0
    %173 = vmatprep.subr.bf16.mxu0 0
    %174 = vmatpush1.bf16.msra.mxu0 0
    %175 = vmatprep.subr.bf16.mxu0 0
    %176 = vmatpush1.bf16.msra.mxu0 0
    %177 = vmatprep.subr.bf16.mxu0 0
    %178 = vmatpush1.bf16.msra.mxu0 0
    %179 = vmatprep.subr.bf16.mxu0 0
    %180 = vmatpush1.bf16.msra.mxu0 0
    %181 = vmatprep.mubr.bf16.mxu0 0
    %182 = vmatmul.mubr.bf16.gmra.mrb[0].mxu0 %v144
    %v183 = vpop.f32.mrb[0].mxu0
    %v184 = vadd.f32 0.0, %v183
    %v185 = vpop.f32.mrb[0].mxu0
    %v186 = vpop.f32.mrb[0].mxu0
    %v187 = vpop.f32.mrb[0].mxu0
    %188 = vdwg.mxu0
    %vm189 = vcmask 7168
    %190 = vst.msk [vmem:[#allocation11] sm:$0xff] %vm189, %v184
    %v191 = vld [vmem:[#allocation8] sm:$0x1]
    %v192 = vpack.c.bf16 %v191, %v191
    %v194 = vsel %vm142, %v192, 0
    %196 = vmatprep.subr.bf16.mxu0 0
    %197 = vmatpush1.bf16.xpose.msra.mxu0 %v144
    %198 = vmatprep.subr.bf16.mxu0 0
    %199 = vmatpush1.bf16.xpose.msra.mxu0 0
    %200 = vmatprep.subr.bf16.mxu0 0
    %201 = vmatpush1.bf16.xpose.msra.mxu0 0
    %202 = vmatprep.subr.bf16.mxu0 0
    %203 = vmatpush1.bf16.xpose.msra.mxu0 0
    %204 = vmatprep.subr.bf16.mxu0 0
    %205 = vmatpush1.bf16.xpose.msra.mxu0 0
    %206 = vmatprep.subr.bf16.mxu0 0
    %207 = vmatpush1.bf16.xpose.msra.mxu0 0
    %208 = vmatprep.subr.bf16.mxu0 0
    %209 = vmatpush1.bf16.xpose.msra.mxu0 0
    %210 = vmatprep.subr.bf16.mxu0 0
    %211 = vmatpush1.bf16.xpose.msra.mxu0 0
    %212 = vmatprep.subr.bf16.mxu0 0
    %213 = vmatpush1.bf16.xpose.msra.mxu0 0
    %214 = vmatprep.subr.bf16.mxu0 0
    %215 = vmatpush1.bf16.xpose.msra.mxu0 0
    %216 = vmatprep.subr.bf16.mxu0 0
    %217 = vmatpush1.bf16.xpose.msra.mxu0 0
    %218 = vmatprep.subr.bf16.mxu0 0
    %219 = vmatpush1.bf16.xpose.msra.mxu0 0
    %220 = vmatprep.subr.bf16.mxu0 0
    %221 = vmatpush1.bf16.xpose.msra.mxu0 0
    %222 = vmatprep.subr.bf16.mxu0 0
    %223 = vmatpush1.bf16.xpose.msra.mxu0 0
    %224 = vmatprep.subr.bf16.mxu0 0
    %225 = vmatpush1.bf16.xpose.msra.mxu0 0
    %226 = vmatprep.subr.bf16.mxu0 0
    %227 = vmatpush1.bf16.xpose.msra.mxu0 0
    %228 = vmatprep.mubr.bf16.mxu0 0
    %229 = vmatmul.mubr.bf16.gmra.mrb[0].mxu0 %v194
    %v230 = vpop.f32.mrb[0].mxu0
    %v231 = vadd.f32 0.0, %v230
    %v232 = vpop.f32.mrb[0].mxu0
    %v233 = vpop.f32.mrb[0].mxu0
    %v234 = vpop.f32.mrb[0].mxu0
    %235 = vdwg.mxu0
    %vm236 = vcmask 57344
    %237 = vst.msk [vmem:[#allocation13] sm:$0x1] %vm236, %v231
    // Predicated region
    $region34: #{tpu_custom_call.1} parent=1 // pred_check
      _
    $region35: #{tpu_custom_call.1} parent=1 // pred_check_branch
      %239 = sbr.rel (0) target = $region37
    $region36: #{tpu_custom_call.1} parent=1 // pred_region
      %s241 = ssub.s32 64, 64
      %242 = vsyncadd [#allocation4], %s241
      %s244 = sshll.u32 [#allocation10], 4
      %s245 = int_to_ptr.vmem [resolvable:$true] %s244
      %247 = dma.vmem_to_hbm [thread:$0]  %s245, 64, %s4, [#allocation4]
    $region37: #{tpu_custom_call.1} parent=1 // pred_fallthru
      _
    // Predicated region
    $region38: #{tpu_custom_call.1} parent=1 // pred_check
      _
    $region39: #{tpu_custom_call.1} parent=1 // pred_check_branch
      %249 = sbr.rel (0) target = $region41
    $region40: #{tpu_custom_call.1} parent=1 // pred_region
      %s251 = ssub.s32 128, 128
      %252 = vsyncadd [#allocation12], %s251
      %s254 = sshll.u32 [#allocation11], 4
      %s255 = int_to_ptr.vmem [resolvable:$true] %s254
      %257 = dma.vmem_to_hbm [thread:$0]  %s255, 128, %s5, [#allocation12]
    $region41: #{tpu_custom_call.1} parent=1 // pred_fallthru
      _
    // Predicated region
    $region42: #{tpu_custom_call.1} parent=1 // pred_check
      _
    $region43: #{tpu_custom_call.1} parent=1 // pred_check_branch
      %259 = sbr.rel (0) target = $region45
    $region44: #{tpu_custom_call.1} parent=1 // pred_region
      %s261 = ssub.s32 16, 16
      %262 = vsyncadd [#allocation12], %s261
      %s264 = sshll.u32 [#allocation13], 4
      %s265 = int_to_ptr.vmem [resolvable:$true] %s264
      %267 = dma.vmem_to_hbm [thread:$0]  %s265, 16, %s6, [#allocation12]
    $region45: #{tpu_custom_call.1} parent=1 // pred_fallthru
      _
    // Predicated region
    $region46: #{tpu_custom_call.1} parent=1 // pred_check
      _
    $region47: #{tpu_custom_call.1} parent=1 // pred_check_branch
      %269 = sbr.rel (0) target = $region49
    $region48: #{tpu_custom_call.1} parent=1 // pred_region
      %270 = dma.done [#allocation4], 64
    $region49: #{tpu_custom_call.1} parent=1 // pred_fallthru
      _
    // Predicated region
    $region50: #{tpu_custom_call.1} parent=1 // pred_check
      _
    $region51: #{tpu_custom_call.1} parent=1 // pred_check_branch
      %272 = sbr.rel (0) target = $region53
    $region52: #{tpu_custom_call.1} parent=1 // pred_region
      %273 = dma.done [#allocation12], 128
    $region53: #{tpu_custom_call.1} parent=1 // pred_fallthru
      _
    // Predicated region
    $region54: #{tpu_custom_call.1} parent=1 // pred_check
      _
    $region55: #{tpu_custom_call.1} parent=1 // pred_check_branch
      %275 = sbr.rel (0) target = $region57
    $region56: #{tpu_custom_call.1} parent=1 // pred_region
      %276 = dma.done [#allocation12], 16
    $region57: #{tpu_custom_call.1} parent=1 // pred_fallthru
      _
    %277 = vsyncpa [#allocation3], 1
    %278 = vsyncpa [#allocation6], 1
    %279 = vsyncpa [#allocation9], 1
    %280 = vsyncpa [#allocation4], 1
    %281 = vsyncpa [#allocation12], 1

</llo_original>
